<compile_context>
chip_gen: v7x
topology: tpu7x:2x2x1
jax: 0.10.0
libtpu: 0.0.40
codegen_flags: <defaults>
</compile_context>

<pallas_src>
import functools

import jax
import jax.numpy as jnp
from jax import lax
from jax.experimental import pallas as pl
from jax.experimental.pallas import tpu as pltpu

_EPS = 1e-6
_LANE = 128


def _round_up(x, m):
    return (x + m - 1) // m * m


def _pick_batch_semantics():
    """CORE_PARALLEL on v7x (2 TCs/chip), plain PARALLEL elsewhere."""
    try:
        kind = jax.devices()[0].device_kind.lower()
    except Exception:  # pragma: no cover - defensive
        kind = ""
    if "v7" in kind:
        return pltpu.CORE_PARALLEL
    return pltpu.PARALLEL


_BATCH_SEM = _pick_batch_semantics()


def _as_float(a):
    return a if jnp.issubdtype(a.dtype, jnp.floating) else a.astype(jnp.float32)


def _soft_iou_kernel(y_true_ref, y_pred_ref, out_ref, num_acc, sum_acc, *,
                     n_valid, tr, needs_mask):
    j = pl.program_id(1)
    last = pl.num_programs(1) - 1

    @pl.when(j == 0)
    def _():
        num_acc[...] = jnp.zeros_like(num_acc)
        sum_acc[...] = jnp.zeros_like(sum_acc)

    def accumulate(mask):
        t = y_true_ref[0].astype(jnp.float32)        # (tr, 128)
        x = y_pred_ref[0].astype(jnp.float32)        # (tr, 128)
        # sigmoid as a single EUP tanh push (cheaper than exp + divide).
        p = 0.5 * jnp.tanh(0.5 * x) + 0.5
        if mask is not None:
            p = jnp.where(mask, p, 0.0)
            t = jnp.where(mask, t, 0.0)
        inter = p * t
        both = p + t
        if tr % 8 == 0:
            # Tile-preserving (8,128)-wise partial reduce: pure VPU vreg adds;
            # keeps each running accumulator at a single vreg.
            inter = inter.reshape(tr // 8, 8, _LANE).sum(axis=0)
            both = both.reshape(tr // 8, 8, _LANE).sum(axis=0)
        num_acc[...] += inter
        sum_acc[...] += both

    if needs_mask:
        # Only the last row-tile can contain padded / out-of-bounds pixels;
        # keep the hot (non-last) steps mask-free.
        @pl.when(j != last)
        def _():
            accumulate(None)

        @pl.when(j == last)
        def _():
            pix = (lax.broadcasted_iota(jnp.int32, (tr, _LANE), 0) * _LANE
                   + lax.broadcasted_iota(jnp.int32, (tr, _LANE), 1)
                   + j * (tr * _LANE))
            accumulate(pix < n_valid)
    else:
        accumulate(None)

    @pl.when(j == last)
    def _():
        # Single cross-lane/sublane reduce, in the epilogue only.
        num = jnp.sum(num_acc[...])
        den = jnp.sum(sum_acc[...]) - num + _EPS     # sum(p + t - p*t) + eps
        cost = 1.0 - num / den
        out_ref[...] = jnp.full(out_ref.shape, cost, dtype=out_ref.dtype)


@functools.partial(jax.jit, static_argnames=("block_rows",))
def soft_iou_loss(y_true, y_pred, sw, block_rows=2048):
    """y_true, y_pred: (B, H, W) or (B, N); sw: (B,) bool. Returns scalar loss."""
    B = y_true.shape[0]
    t = _as_float(y_true).reshape(B, -1)
    x = _as_float(y_pred).reshape(B, -1)
    N = t.shape[1]

    # Lane-dense (R, 128) per-sample view. Reshape is free when N % 128 == 0;
    # otherwise a zero-pad copy is unavoidable for this layout (padded pixels
    # are masked out inside the kernel via the true pixel count N).
    Np = _round_up(N, _LANE)
    if Np != N:
        t = jnp.pad(t, ((0, 0), (0, Np - N)))
        x = jnp.pad(x, ((0, 0), (0, Np - N)))
    R = Np // _LANE
    t3 = t.reshape(B, R, _LANE)
    x3 = x.reshape(B, R, _LANE)

    # Row-tile: multiple of 8 sublanes (so the per-step partial reduce is a
    # tile-preserving reshape), <= R, sized so the grid covers R with minimal
    # overhang. Tiny samples (R < 8) use the full row extent.
    # f32 working set: 2 inputs x 2 buffers x tr*128*4B = 4 MiB at tr=2048,
    # comfortably under the scoped-VMEM default on v5e/v6e/v7x.
    if R >= 8:
        n_steps = -(-R // block_rows)                       # ceil
        tr = min(_round_up(-(-R // n_steps), 8), (R // 8) * 8)
    else:
        tr = R
    grid_j = -(-R // tr)
    needs_mask = (grid_j * tr * _LANE) != N                 # static
    acc_rows = 8 if tr % 8 == 0 else tr

    kernel = functools.partial(_soft_iou_kernel,
                               n_valid=N, tr=tr, needs_mask=needs_mask)

    costs = pl.pallas_call(
        kernel,
        out_shape=jax.ShapeDtypeStruct((B, 1, _LANE), jnp.float32),
        grid_spec=pltpu.PrefetchScalarGridSpec(
            num_scalar_prefetch=0,
            grid=(B, grid_j),
            in_specs=[
                pl.BlockSpec((1, tr, _LANE), lambda b, j: (b, j, 0)),
                pl.BlockSpec((1, tr, _LANE), lambda b, j: (b, j, 0)),
            ],
            out_specs=pl.BlockSpec((1, 1, _LANE), lambda b, j: (b, 0, 0)),
            scratch_shapes=[
                pltpu.VMEM((acc_rows, _LANE), jnp.float32),
                pltpu.VMEM((acc_rows, _LANE), jnp.float32),
            ],
        ),
        compiler_params=pltpu.CompilerParams(
            # Reduction axis (j) must stay innermost + arbitrary: the j==0
            # reset / j==last finalize rely on it.
            dimension_semantics=(_BATCH_SEM, pltpu.ARBITRARY)),
    )(t3, x3)

    cost = costs[:, 0, 0]                                   # (B,) per-sample cost
    # sw.any() branch (data-dependent in PyTorch) done as a select in JAX.
    swf = sw.astype(jnp.float32)
    sw_sum = jnp.sum(swf)
    masked_mean = jnp.sum(cost * swf) / jnp.maximum(sw_sum, 1.0)
    plain_mean = jnp.mean(cost)
    return jnp.where(sw_sum > 0, masked_mean, plain_mean)


def _reference(y_true, y_pred, sw):
    B = y_true.shape[0]
    t = y_true.reshape(B, -1).astype(jnp.float32)
    p = jax.nn.sigmoid(y_pred.reshape(B, -1).astype(jnp.float32))
    num = jnp.sum(p * t, axis=1)
    den = jnp.sum(p + t - p * t, axis=1) + _EPS
    cost = 1.0 - num / den
    swf = sw.astype(jnp.float32)
    masked = jnp.sum(cost * swf) / jnp.maximum(jnp.sum(swf), 1.0)
    plain = jnp.mean(cost)
    return jnp.where(jnp.any(sw), masked, plain)


if __name__ == "__main__":
    key = jax.random.PRNGKey(0)
    k1, k2 = jax.random.split(key)

    # Case 1: aligned tiny masks (zero-copy path, R < 8).
    B, H, W = 2, 16, 16
    y_true = (jax.random.uniform(k1, (B, H, W)) > 0.5).astype(jnp.float32)
    y_pred = jax.random.normal(k2, (B, H, W), dtype=jnp.float32)
    sw = jnp.array([True, False])
    loss = jax.block_until_ready(soft_iou_loss(y_true, y_pred, sw))
    ref = _reference(y_true, y_pred, sw)
    assert jnp.allclose(loss, ref, atol=1e-4, rtol=1e-4), (loss, ref)

    # Case 2: "sw has no True entries" branch.
    sw0 = jnp.array([False, False])
    loss2 = jax.block_until_ready(soft_iou_loss(y_true, y_pred, sw0))
    ref2 = _reference(y_true, y_pred, sw0)
    assert jnp.allclose(loss2, ref2, atol=1e-4, rtol=1e-4), (loss2, ref2)

    # Case 3: non-128-multiple spatial shape -> lane pad + in-kernel mask,
    # ragged last row-tile.
    k3, k4 = jax.random.split(k2)
    B2, H2, W2 = 3, 61, 77
    yt = (jax.random.uniform(k3, (B2, H2, W2)) > 0.5).astype(jnp.float32)
    yp = jax.random.normal(k4, (B2, H2, W2), dtype=jnp.float32)
    sw3 = jnp.array([True, False, True])
    loss3 = jax.block_until_ready(soft_iou_loss(yt, yp, sw3))
    ref3 = _reference(yt, yp, sw3)
    assert jnp.allclose(loss3, ref3, atol=1e-4, rtol=1e-4), (loss3, ref3)

    # Case 4: aligned shape with a small block_rows to exercise the multi-step
    # accumulation path (grid_j > 1, no mask).
    k5, k6 = jax.random.split(k4)
    B3, H3, W3 = 2, 64, 64
    yt4 = (jax.random.uniform(k5, (B3, H3, W3)) > 0.5).astype(jnp.float32)
    yp4 = jax.random.normal(k6, (B3, H3, W3), dtype=jnp.float32)
    sw4 = jnp.array([True, True])
    loss4 = jax.block_until_ready(soft_iou_loss(yt4, yp4, sw4, block_rows=8))
    ref4 = _reference(yt4, yp4, sw4)
    assert jnp.allclose(loss4, ref4, atol=1e-4, rtol=1e-4), (loss4, ref4)

    print("KERNEL_OK")
</pallas_src>

<mosaic_0001>
module attributes {stable_mosaic.version = 11 : i64} {
  func.func @_soft_iou_kernel(%arg0: i32, %arg1: i32, %arg2: memref<1x2x128xf32, #tpu.memory_space<vmem>>, %arg3: memref<1x2x128xf32, #tpu.memory_space<vmem>>, %arg4: memref<1x1x128xf32, #tpu.memory_space<vmem>>, %arg5: memref<2x128xf32, #tpu.memory_space<vmem>>, %arg6: memref<2x128xf32, #tpu.memory_space<vmem>>) attributes {dimension_semantics = [#tpu.dimension_semantics<parallel>, #tpu.dimension_semantics<arbitrary>], iteration_bounds = array<i64: 2, 1>, scalar_prefetch = 0 : i64, scratch_operands = 2 : i64, tpu.core_type = #tpu.core_type<tc>, window_params = [{transform_indices = @transform_0, window_bounds = array<i64: 1, 2, 128>}, {transform_indices = @transform_1, window_bounds = array<i64: 1, 2, 128>}, {transform_indices = @transform_2, window_bounds = array<i64: 1, 1, 128>}]} {
    %c0_i32 = arith.constant 0 : i32
    %0 = arith.cmpi eq, %arg1, %c0_i32 : i32
    %1 = arith.extui %0 : i1 to i32
    %c0_i32_0 = arith.constant 0 : i32
    %2 = arith.cmpi ne, %1, %c0_i32_0 : i32
    scf.if %2 {
      %cst_18 = arith.constant 0.000000e+00 : f32
      %25 = vector.broadcast %cst_18 : f32 to vector<2x128xf32>
      %c0_19 = arith.constant 0 : index
      %c0_20 = arith.constant 0 : index
      %26 = vector.load %arg5[%c0_19, %c0_20] : memref<2x128xf32, #tpu.memory_space<vmem>>, vector<2x128xf32>
      tpu.vector_store %arg5[%c0_19, %c0_20], %25 {strides = array<i32>} : memref<2x128xf32, #tpu.memory_space<vmem>>, vector<2x128xf32>,
      %cst_21 = arith.constant 0.000000e+00 : f32
      %27 = vector.broadcast %cst_21 : f32 to vector<2x128xf32>
      %c0_22 = arith.constant 0 : index
      %c0_23 = arith.constant 0 : index
      %28 = vector.load %arg6[%c0_22, %c0_23] : memref<2x128xf32, #tpu.memory_space<vmem>>, vector<2x128xf32>
      tpu.vector_store %arg6[%c0_22, %c0_23], %27 {strides = array<i32>} : memref<2x128xf32, #tpu.memory_space<vmem>>, vector<2x128xf32>,
    } else {
    }
    %c0 = arith.constant 0 : index
    %c0_1 = arith.constant 0 : index
    %c0_2 = arith.constant 0 : index
    %3 = vector.load %arg2[%c0, %c0_1, %c0_2] : memref<1x2x128xf32, #tpu.memory_space<vmem>>, vector<1x2x128xf32>
    %4 = vector.shape_cast %3 : vector<1x2x128xf32> to vector<2x128xf32>
    %c0_3 = arith.constant 0 : index
    %c0_4 = arith.constant 0 : index
    %c0_5 = arith.constant 0 : index
    %5 = vector.load %arg3[%c0_3, %c0_4, %c0_5] : memref<1x2x128xf32, #tpu.memory_space<vmem>>, vector<1x2x128xf32>
    %6 = vector.shape_cast %5 : vector<1x2x128xf32> to vector<2x128xf32>
    %cst = arith.constant 5.000000e-01 : f32
    %7 = vector.broadcast %cst : f32 to vector<2x128xf32>
    %8 = arith.mulf %7, %6 : vector<2x128xf32>
    %9 = math.tanh %8 : vector<2x128xf32>
    %cst_6 = arith.constant 5.000000e-01 : f32
    %10 = vector.broadcast %cst_6 : f32 to vector<2x128xf32>
    %11 = arith.mulf %10, %9 : vector<2x128xf32>
    %cst_7 = arith.constant 5.000000e-01 : f32
    %12 = vector.broadcast %cst_7 : f32 to vector<2x128xf32>
    %13 = arith.addf %11, %12 : vector<2x128xf32>
    %14 = arith.mulf %13, %4 : vector<2x128xf32>
    %15 = arith.addf %13, %4 : vector<2x128xf32>
    %c0_8 = arith.constant 0 : index
    %c0_9 = arith.constant 0 : index
    %16 = vector.load %arg5[%c0_8, %c0_9] : memref<2x128xf32, #tpu.memory_space<vmem>>, vector<2x128xf32>
    %17 = arith.addf %16, %14 : vector<2x128xf32>
    %c0_10 = arith.constant 0 : index
    %c0_11 = arith.constant 0 : index
    %18 = vector.load %arg5[%c0_10, %c0_11] : memref<2x128xf32, #tpu.memory_space<vmem>>, vector<2x128xf32>
    tpu.vector_store %arg5[%c0_10, %c0_11], %17 {strides = array<i32>} : memref<2x128xf32, #tpu.memory_space<vmem>>, vector<2x128xf32>,
    %c0_12 = arith.constant 0 : index
    %c0_13 = arith.constant 0 : index
    %19 = vector.load %arg6[%c0_12, %c0_13] : memref<2x128xf32, #tpu.memory_space<vmem>>, vector<2x128xf32>
    %20 = arith.addf %19, %15 : vector<2x128xf32>
    %c0_14 = arith.constant 0 : index
    %c0_15 = arith.constant 0 : index
    %21 = vector.load %arg6[%c0_14, %c0_15] : memref<2x128xf32, #tpu.memory_space<vmem>>, vector<2x128xf32>
    tpu.vector_store %arg6[%c0_14, %c0_15], %20 {strides = array<i32>} : memref<2x128xf32, #tpu.memory_space<vmem>>, vector<2x128xf32>,
    %c0_i32_16 = arith.constant 0 : i32
    %22 = arith.cmpi eq, %arg1, %c0_i32_16 : i32
    %23 = arith.extui %22 : i1 to i32
    %c0_i32_17 = arith.constant 0 : i32
    %24 = arith.cmpi ne, %23, %c0_i32_17 : i32
    scf.if %24 {
      %c0_18 = arith.constant 0 : index
      %c0_19 = arith.constant 0 : index
      %25 = vector.load %arg5[%c0_18, %c0_19] : memref<2x128xf32, #tpu.memory_space<vmem>>, vector<2x128xf32>
      %26 = vector.shape_cast %25 : vector<2x128xf32> to vector<1x2x128xf32>
      %cst_20 = arith.constant dense<0.000000e+00> : vector<1xf32>
      %27 = vector.multi_reduction <add>, %26, %cst_20 [1, 2] : vector<1x2x128xf32> to vector<1xf32>
      %28 = vector.shape_cast %27 : vector<1xf32> to vector<1x1x1xf32>
      %29 = vector.extract %28[0, 0, 0] : f32 from vector<1x1x1xf32>
      %c0_21 = arith.constant 0 : index
      %c0_22 = arith.constant 0 : index
      %30 = vector.load %arg6[%c0_21, %c0_22] : memref<2x128xf32, #tpu.memory_space<vmem>>, vector<2x128xf32>
      %31 = vector.shape_cast %30 : vector<2x128xf32> to vector<1x2x128xf32>
      %cst_23 = arith.constant dense<0.000000e+00> : vector<1xf32>
      %32 = vector.multi_reduction <add>, %31, %cst_23 [1, 2] : vector<1x2x128xf32> to vector<1xf32>
      %33 = vector.shape_cast %32 : vector<1xf32> to vector<1x1x1xf32>
      %34 = vector.extract %33[0, 0, 0] : f32 from vector<1x1x1xf32>
      %35 = arith.subf %34, %29 : f32
      %cst_24 = arith.constant 9.99999997E-7 : f32
      %36 = arith.addf %35, %cst_24 : f32
      %37 = arith.divf %29, %36 : f32
      %cst_25 = arith.constant 1.000000e+00 : f32
      %38 = arith.subf %cst_25, %37 : f32
      %39 = vector.broadcast %38 : f32 to vector<1x1x128xf32>
      %c0_26 = arith.constant 0 : index
      %c0_27 = arith.constant 0 : index
      %c0_28 = arith.constant 0 : index
      %40 = vector.load %arg4[%c0_26, %c0_27, %c0_28] : memref<1x1x128xf32, #tpu.memory_space<vmem>>, vector<1x1x128xf32>
      tpu.vector_store %arg4[%c0_26, %c0_27, %c0_28], %39 {strides = array<i32>} : memref<1x1x128xf32, #tpu.memory_space<vmem>>, vector<1x1x128xf32>,
    } else {
    }
    return
  }
  func.func @transform_0(%arg0: i32, %arg1: i32) -> (i32, i32, i32) {
    %c0_i32 = arith.constant 0 : i32
    %c0_i32_0 = arith.constant 0 : i32
    return %arg0, %arg1, %c0_i32 : i32, i32, i32
  }
  func.func @transform_1(%arg0: i32, %arg1: i32) -> (i32, i32, i32) {
    %c0_i32 = arith.constant 0 : i32
    %c0_i32_0 = arith.constant 0 : i32
    return %arg0, %arg1, %c0_i32 : i32, i32, i32
  }
  func.func @transform_2(%arg0: i32, %arg1: i32) -> (i32, i32, i32) {
    %c0_i32 = arith.constant 0 : i32
    %c0_i32_0 = arith.constant 0 : i32
    %c0_i32_1 = arith.constant 0 : i32
    return %arg0, %c0_i32, %c0_i32_0 : i32, i32, i32
  }
}

</mosaic_0001>

<llo_original>
// kernel: soft_iou_loss.1
$region0: #{soft_iou_loss.1}
  #allocation0 [shape = 'u32[]', space=smem, size = 0x4, offset = 0x4, fixed_abs, tag = 'smem constant byte address 0x4 - core index']
  #allocation1 [shape = 'u32[144,128]{1,0:T(1,128)}', space=vmem, size = 0x12000, scoped, tag = 'internal scratch']
  #allocation2 [shape = 'f32[2,128]{1,0:T(2,128)}', space=vmem, size = 0x400, scoped, tag = 'scratch operand']
  #allocation3 [shape = 'f32[2,128]{1,0:T(2,128)}', space=vmem, size = 0x400, scoped, tag = 'scratch operand']
  %s0 = inlined_call_operand.vmem [shape: f32[2,2,128], index: 0, kind: input, shape index: {}]
  %s1 = inlined_call_operand.vmem [shape: f32[2,2,128], index: 1, kind: input, shape index: {}]
  %s2 = inlined_call_operand.vmem [shape: f32[2,1,128], index: 2, kind: output, shape index: {}]
  %s3 = sld [smem:[#allocation0]]
  $region49: #{soft_iou_loss.1} parent=0
    _
  %s5 = ssub.s32 1, %s3
  %s6 = scalar_select 0, %s5, %s3
  loop: start=0, step=1, limit=4
  $region2: #{soft_iou_loss.1} parent=0 // loop_pre_header
    _
  $region3: #{soft_iou_loss.1} parent=0 // loop_header
    %s8 = sphi 0, %s12
    %p9 = scmp.ge.s32.totalorder %s8, 4
    %s15 = sphi 0, %s27
    %s16 = sphi 0, %s23
    %s17 = sphi 0, %s15
    %s18 = sphi 0, %s16
    %s19 = sphi 0, %s17
    %s20 = sphi 0, %s18
    %s32 = sphi 0, %s34
    %s35 = sphi 0, %s32
    %s36 = sphi 0, %s35
    %s52 = sphi 0, %s36
    %s60 = sphi 0, %s62
    %s63 = sphi 0, %s60
    %s64 = sphi 0, %s63
    %s80 = sphi 0, %s64
    %s86 = sphi 0, %s88
    %s89 = sphi 0, %s86
    %s90 = sphi 0, %s89
    %s106 = sphi 0, %s90
  $region4: #{soft_iou_loss.1} parent=0 // loop_header_branch
    %11 = sbr.rel (%p9) target = $region8
  $region5: #{soft_iou_loss.1} parent=0 // loop_body
    %s13 = ssub.s32 %s8, 1
    %s14 = ssub.s32 %s8, 2
    %s21 = sadd.s32 1, %s16
    %p22 = scmp.ge.s32.totalorder %s21, 1
    %s23 = scalar_select %p22, 0, %s21
    %s24 = sadd.s32 1, %s15
    %s25 = scalar_select %p22, %s24, %s15
    %p26 = scmp.ge.s32.totalorder %s25, 2
    %s27 = scalar_select %p26, 0, %s25
    %s28 = ssub.s32 %s15, %s27
    %s29 = ssub.s32 %s16, %s23
    %s30 = sor.u32 %s28, %s29
    %p31 = scmp.eq.s32.totalorder %s30, 0
    %s33 = sadd.s32 %s32, 1
    %s34 = scalar_select %p31, %s32, %s33
    %p37 = pneg %p31
    %p38 = scmp.eq.s32.totalorder %s8, 1
    %p39 = por %p37, %p38
    %p40 = scmp.ne.s32.totalorder %s32, %s35
    %p41 = scmp.eq.s32.totalorder %s8, 0
    %p42 = por %p40, %p41
    %p43 = scmp.ne.s32.totalorder %s32, %s35
    %p44 = scmp.eq.s32.totalorder %s13, 1
    %p45 = por %p43, %p44
    %p46 = scmp.ne.s32.totalorder %s35, %s36
    %p47 = scmp.eq.s32.totalorder %s13, 0
    %p48 = por %p46, %p47
    %p49 = scmp.ne.s32.totalorder %s35, %s36
    %p50 = scmp.eq.s32.totalorder %s14, 1
    %p51 = por %p49, %p50
    %p53 = scmp.ne.s32.totalorder %s36, %s52
    %p54 = scmp.eq.s32.totalorder %s14, 0
    %p55 = por %p53, %p54
    %s56 = ssub.s32 %s15, %s27
    %s57 = ssub.s32 %s16, %s23
    %s58 = sor.u32 %s56, %s57
    %p59 = scmp.eq.s32.totalorder %s58, 0
    %s61 = sadd.s32 %s60, 1
    %s62 = scalar_select %p59, %s60, %s61
    %p65 = pneg %p59
    %p66 = scmp.eq.s32.totalorder %s8, 1
    %p67 = por %p65, %p66
    %p68 = scmp.ne.s32.totalorder %s60, %s63
    %p69 = scmp.eq.s32.totalorder %s8, 0
    %p70 = por %p68, %p69
    %p71 = scmp.ne.s32.totalorder %s60, %s63
    %p72 = scmp.eq.s32.totalorder %s13, 1
    %p73 = por %p71, %p72
    %p74 = scmp.ne.s32.totalorder %s63, %s64
    %p75 = scmp.eq.s32.totalorder %s13, 0
    %p76 = por %p74, %p75
    %p77 = scmp.ne.s32.totalorder %s63, %s64
    %p78 = scmp.eq.s32.totalorder %s14, 1
    %p79 = por %p77, %p78
    %p81 = scmp.ne.s32.totalorder %s64, %s80
    %p82 = scmp.eq.s32.totalorder %s14, 0
    %p83 = por %p81, %p82
    %s84 = ssub.s32 %s15, %s27
    %p85 = scmp.eq.s32.totalorder %s84, 0
    %s87 = sadd.s32 %s86, 1
    %s88 = scalar_select %p85, %s86, %s87
    %p91 = pneg %p85
    %p92 = scmp.eq.s32.totalorder %s8, 1
    %p93 = por %p91, %p92
    %p94 = scmp.ne.s32.totalorder %s86, %s89
    %p95 = scmp.eq.s32.totalorder %s8, 0
    %p96 = por %p94, %p95
    %p97 = scmp.ne.s32.totalorder %s86, %s89
    %p98 = scmp.eq.s32.totalorder %s13, 1
    %p99 = por %p97, %p98
    %p100 = scmp.ne.s32.totalorder %s89, %s90
    %p101 = scmp.eq.s32.totalorder %s13, 0
    %p102 = por %p100, %p101
    %p103 = scmp.ne.s32.totalorder %s89, %s90
    %p104 = scmp.eq.s32.totalorder %s14, 1
    %p105 = por %p103, %p104
    %p107 = scmp.ne.s32.totalorder %s90, %s106
    %p108 = scmp.eq.s32.totalorder %s14, 0
    %p109 = por %p107, %p108
    %p110 = scmp.le.s32.totalorder 1, %s8
    %p111 = scmp.lt.s32.totalorder %s8, 3
    %p112 = pnand %p110, %p111
    %p113 = pneg %p112
    // Predicated region
    $region9: #{soft_iou_loss.1} parent=5 // pred_check
      _
    $region10: #{soft_iou_loss.1} parent=5 // pred_check_branch
      %115 = sbr.rel (%p112) target = $region12
    $region11: #{soft_iou_loss.1} parent=5 // pred_region
      %s116 = ssub.s32 %s8, 1
    $region12: #{soft_iou_loss.1} parent=5 // pred_fallthru
      _
    %p117 = scmp.lt.s32.totalorder %s8, 2
    // Predicated region
    $region13: #{soft_iou_loss.1} parent=5 // pred_check
      %p118 = pneg %p117
    $region14: #{soft_iou_loss.1} parent=5 // pred_check_branch
      %120 = sbr.rel (%p118) target = $region16
    $region15: #{soft_iou_loss.1} parent=5 // pred_region
      // Predicated region
      $region17: #{soft_iou_loss.1} parent=15 // pred_check
        %p121 = pneg %p42
      $region18: #{soft_iou_loss.1} parent=15 // pred_check_branch
        %123 = sbr.rel (%p121) target = $region20
      $region19: #{soft_iou_loss.1} parent=15 // pred_region
        %p124 = scmp.lt.s32.totalorder %s15, 1
        %s125 = scalar_select %p124, %s15, 1
        %p126 = scmp.lt.s32.totalorder %s16, 0
        %s127 = scalar_select %p126, %s16, 0
        %s128 = sadd.s32 %s127, %s125
        %s129 = smul.addr %s128, 2
        %s130 = scalar_lea.vmem %s0, %s129
      $region20: #{soft_iou_loss.1} parent=15 // pred_fallthru
        _
      // Predicated region
      $region21: #{soft_iou_loss.1} parent=15 // pred_check
        %p131 = pneg %p70
      $region22: #{soft_iou_loss.1} parent=15 // pred_check_branch
        %133 = sbr.rel (%p131) target = $region24
      $region23: #{soft_iou_loss.1} parent=15 // pred_region
        %p134 = scmp.lt.s32.totalorder %s15, 1
        %s135 = scalar_select %p134, %s15, 1
        %p136 = scmp.lt.s32.totalorder %s16, 0
        %s137 = scalar_select %p136, %s16, 0
        %s138 = sadd.s32 %s137, %s135
        %s139 = smul.addr %s138, 2
        %s140 = scalar_lea.vmem %s1, %s139
      $region24: #{soft_iou_loss.1} parent=15 // pred_fallthru
        _
    $region16: #{soft_iou_loss.1} parent=5 // pred_fallthru
      _
    %p141 = scmp.le.s32.totalorder 1, %s8
    %p142 = scmp.lt.s32.totalorder %s8, 3
    %p143 = pnand %p141, %p142
    %p144 = pneg %p143
    // Predicated region
    $region25: #{soft_iou_loss.1} parent=5 // pred_check
      _
    $region26: #{soft_iou_loss.1} parent=5 // pred_check_branch
      %146 = sbr.rel (%p143) target = $region28
    $region27: #{soft_iou_loss.1} parent=5 // pred_region
      %s147 = ssub.s32 %s8, 1
      %p148 = scmp.lt.s32.totalorder %s17, 1
      %s149 = scalar_select %p148, %s17, 1
      %p150 = scmp.lt.s32.totalorder %s18, 0
      %s151 = scalar_select %p150, %s18, 0
      %s152 = sadd.s32 %s151, %s149
      %s153 = smul.addr %s152, 2
      %s154 = scalar_lea.vmem %s0, %s153
      %p155 = pneg %p48
      %p156 = pneg %p45
      %p157 = scmp.lt.s32.totalorder %s17, 1
      %s158 = scalar_select %p157, %s17, 1
      %p159 = scmp.lt.s32.totalorder %s18, 0
      %s160 = scalar_select %p159, %s18, 0
      %s161 = sadd.s32 %s160, %s158
      %s162 = smul.addr %s161, 2
      %s163 = scalar_lea.vmem %s1, %s162
      %p164 = pneg %p76
      %p165 = pneg %p73
      %p166 = pneg %p102
      %p167 = pneg %p99
      %p168 = scmp.lt.s32.totalorder %s17, 1
      %s169 = scalar_select %p168, %s17, 1
      %s170 = scalar_lea.vmem %s2, %s169
      %p171 = scmp.lt.s32.totalorder %s17, 1
      %s172 = scalar_select %p171, %s17, 1
      %p173 = scmp.lt.s32.totalorder %s18, 0
      %s174 = scalar_select %p173, %s18, 0
      %s175 = sadd.s32 %s174, %s172
      %s176 = smul.addr %s175, 2
      %s177 = scalar_lea.vmem %s0, %s176
      %p178 = scmp.lt.s32.totalorder %s17, 1
      %s179 = scalar_select %p178, %s17, 1
      %p180 = scmp.lt.s32.totalorder %s18, 0
      %s181 = scalar_select %p180, %s18, 0
      %s182 = sadd.s32 %s181, %s179
      %s183 = smul.addr %s182, 2
      %s184 = scalar_lea.vmem %s1, %s183
      %p185 = scmp.lt.s32.totalorder %s17, 1
      %s186 = scalar_select %p185, %s17, 1
      %s187 = scalar_lea.vmem %s2, %s186
      %p188 = scmp.eq.s32.totalorder %s18, 0
      // Predicated region
      $region29: #{soft_iou_loss.1} parent=27 // pred_check
        %p189 = pneg %p188
      $region30: #{soft_iou_loss.1} parent=27 // pred_check_branch
        %191 = sbr.rel (%p189) target = $region32
      $region31: #{soft_iou_loss.1} parent=27 // pred_region
        %192 = vst [vmem:[#allocation2] sm:$0x3] 0.0
        %193 = vst [vmem:[#allocation3] sm:$0x3] 0.0
      $region32: #{soft_iou_loss.1} parent=27 // pred_fallthru
        _
      %v194 = vld [vmem:[%s177] sm:$0x3]
      %v195 = vld [vmem:[%s184] sm:$0x3]
      %v196 = vmul.f32 %v195, 0.5
      %v197 = vtanh.pop %v196
      %v198 = vmul.f32 %v197, 0.5
      %v199 = vadd.f32 %v198, 0.5
      %v200 = vmul.f32 %v199, %v194
      %v201 = vadd.f32 %v199, %v194
      %v202 = vld [vmem:[#allocation2] sm:$0x3]
      %v203 = vadd.f32 %v202, %v200
      %204 = vst [vmem:[#allocation2] sm:$0x3] %v203
      %v205 = vld [vmem:[#allocation3] sm:$0x3]
      %v206 = vadd.f32 %v205, %v201
      %207 = vst [vmem:[#allocation3] sm:$0x3] %v206
      // Predicated region
      $region33: #{soft_iou_loss.1} parent=27 // pred_check
        %p208 = pneg %p188
      $region34: #{soft_iou_loss.1} parent=27 // pred_check_branch
        %210 = sbr.rel (%p208) target = $region36
      $region35: #{soft_iou_loss.1} parent=27 // pred_region
        %v211 = vld [vmem:[#allocation2] sm:$0x3]
        %vm212 = vcmask 1041408
        %v213 = vsel %vm212, %v211, 0.0
        %214 = vadd.xlane.f32.xlu0 %v213
        %v215 = vpop.xlane.xlu0 %214
        %v216 = vrot.slane %v215, 4
        %v217 = vadd.f32 %v215, %v216
        %v218 = vrot.slane %v217, 2
        %v219 = vadd.f32 %v217, %v218
        %v220 = vrot.slane %v219, 1
        %v221 = vadd.f32 %v219, %v220
        %s222 = vtos %v221
        %v223 = vld [vmem:[#allocation3] sm:$0x3]
        %v224 = vsel %vm212, %v223, 0.0
        %225 = vadd.xlane.f32.xlu0 %v224
        %v226 = vpop.xlane.xlu0 %225
        %v227 = vrot.slane %v226, 4
        %v228 = vadd.f32 %v226, %v227
        %v229 = vrot.slane %v228, 2
        %v230 = vadd.f32 %v228, %v229
        %v231 = vrot.slane %v230, 1
        %v232 = vadd.f32 %v230, %v231
        %s233 = vtos %v232
        %s234 = ssub.f32 %s233, %s222
        %s235 = sadd.f32 %s234, 1e-06
        %v236 = vstv %s235
        %v237 = vrcp.pop %v236
        %s238 = vtos %v237
        %s239 = smul.f32 %s222, %s238
        %s240 = ssub.f32 1.0, %s239
        %v241 = vstv %s240
        %242 = vst [vmem:[%s187] sm:$0x1] %v241
      $region36: #{soft_iou_loss.1} parent=27 // pred_fallthru
        _
      %p243 = scmp.lt.s32.totalorder %s17, 1
      %s244 = scalar_select %p243, %s17, 1
      %s245 = scalar_lea.vmem %s2, %s244
      // Predicated region
      $region37: #{soft_iou_loss.1} parent=27 // pred_check
        %p246 = pneg %p99
      $region38: #{soft_iou_loss.1} parent=27 // pred_check_branch
        %248 = sbr.rel (%p246) target = $region40
      $region39: #{soft_iou_loss.1} parent=27 // pred_region
        _
      $region40: #{soft_iou_loss.1} parent=27 // pred_fallthru
        _
    $region28: #{soft_iou_loss.1} parent=5 // pred_fallthru
      _
    %p249 = scmp.le.s32.totalorder 2, %s8
    // Predicated region
    $region41: #{soft_iou_loss.1} parent=5 // pred_check
      %p250 = pneg %p249
    $region42: #{soft_iou_loss.1} parent=5 // pred_check_branch
      %252 = sbr.rel (%p250) target = $region44
    $region43: #{soft_iou_loss.1} parent=5 // pred_region
      %s253 = ssub.s32 %s8, 2
      // Predicated region
      $region45: #{soft_iou_loss.1} parent=43 // pred_check
        %p254 = pneg %p105
      $region46: #{soft_iou_loss.1} parent=43 // pred_check_branch
        %256 = sbr.rel (%p254) target = $region48
      $region47: #{soft_iou_loss.1} parent=43 // pred_region
        %p257 = scmp.lt.s32.totalorder %s19, 1
        %s258 = scalar_select %p257, %s19, 1
        %s259 = scalar_lea.vmem %s2, %s258
      $region48: #{soft_iou_loss.1} parent=43 // pred_fallthru
        _
    $region44: #{soft_iou_loss.1} parent=5 // pred_fallthru
      _
  $region6: #{soft_iou_loss.1} parent=0 // loop_footer
    %s12 = sadd.s32 1, %s8
  $region7: #{soft_iou_loss.1} parent=0 // loop_footer_branch
    %7 = sbr.rel target = $region3
  $region8: #{soft_iou_loss.1} parent=0 // loop_exit
    _

</llo_original>
